<compile_context>
chip_gen: v7x
topology: tpu7x:2x2x1
jax: 0.10.0
libtpu: 0.0.40
codegen_flags: <defaults>
</compile_context>

<pallas_src>
import functools

import numpy as np
import jax
import jax.numpy as jnp
from jax import lax
from jax.experimental import pallas as pl
from jax.experimental.pallas import tpu as pltpu


# ---------------------------------------------------------------- kernel math

def _silu(x):
    # SiLU in f32 (v5e has no bf16 VPU/EUP); reciprocal on the EUP slot.
    return x * pl.reciprocal(1.0 + jnp.exp(-x), approx=True)


def _sbottleneck_kernel(x_ref, w1_ref, b1_ref, w2_ref, b2_ref, *rest,
                        H, TH, add):
    """Fused cv1(3x3 Conv+BN+SiLU) -> cv2(3x3 Conv+BN+SiLU) -> (+x).

    x_ref : (TH+4, (W+2)*Cin)  bf16 row-slab (2-row halo, 1-col zero pad folded in)
    w1_ref: (3, (W+2)*Cin, W*Cmid) bf16 band weights (one per kh tap)
    w2_ref: (3,  W*Cmid,   W*Cout) bf16 band weights (cv2 zero-pad folded into band)
    b1_ref/b2_ref: (1, W*Cmid)/(1, W*Cout) f32 folded-BN biases (tiled over W)
    o_ref : (TH, W*Cout) f32 lane-dense output tile
    y_scr : (TH+2, W*Cmid) bf16 VMEM scratch for the intermediate (+1-row halo)
    """
    if add:
        xres_ref, o_ref, y_scr = rest
    else:
        o_ref, y_scr = rest

    t = pl.program_id(1)
    TH2 = TH + 2
    wid1 = w1_ref.shape[-1]          # W * Cmid
    wid2 = w2_ref.shape[-1]          # W * Cout

    # ---- cv1 on a +1-row halo region: y row s' <-> image row r = t*TH + s' - 1
    acc1 = jnp.zeros((TH2, wid1), jnp.float32)
    for kh in range(3):              # static unroll over the 3 row taps
        acc1 = acc1 + jnp.dot(x_ref[kh:kh + TH2, :], w1_ref[kh],
                              preferred_element_type=jnp.float32)
    y = _silu(acc1 + b1_ref[...])

    # cv2 must see zero padding of the *intermediate*: zero halo rows that fall
    # outside the image (the column zero-padding is folded into w2's band).
    r = t * TH - 1 + lax.broadcasted_iota(jnp.int32, (TH2, wid1), 0)
    y = jnp.where((r >= 0) & (r < H), y, 0.0)
    y_scr[...] = y.astype(jnp.bfloat16)

    # ---- cv2 + fused residual epilogue
    acc2 = jnp.zeros((TH, wid2), jnp.float32)
    for kh in range(3):
        acc2 = acc2 + jnp.dot(y_scr[kh:kh + TH, :], w2_ref[kh],
                              preferred_element_type=jnp.float32)
    out = _silu(acc2 + b2_ref[...])
    if add:                           # shortcut and c1 == c2 (lanes line up)
        out = out + xres_ref[...].astype(jnp.float32)
    o_ref[...] = out.astype(o_ref.dtype)


# ------------------------------------------------------------- pallas wrapper

def sbottleneck_pallas(x_nhwc, band1, bias1, band2, bias2, *, add, tile_h=8):
    """x_nhwc: (N, H, W, Cin) f32.  Returns (N, H, W, Cout) f32."""
    N, H, W, Cin = x_nhwc.shape
    Cmid = band1.shape[-1] // W
    Cout = band2.shape[-1] // W
    # TH must divide H and be a multiple of 8 (block constraint), else one tile.
    TH = tile_h if (H % tile_h == 0 and tile_h % 8 == 0) else H
    T = H // TH

    xb = x_nhwc.astype(jnp.bfloat16)                       # bf16 in HBM
    xp = jnp.pad(xb, ((0, 0), (2, 2), (1, 1), (0, 0)))     # 2-row / 1-col halo
    xp = xp.reshape(N, H + 4, (W + 2) * Cin)               # lane-dense row layout
    # Overlapping row slabs: ~(TH+4)/TH read amplification, no 9x im2col in HBM.
    slabs = jnp.stack([xp[:, t * TH: t * TH + TH + 4, :] for t in range(T)],
                      axis=1)                              # (N, T, TH+4, (W+2)*Cin)

    bias1_t = jnp.tile(bias1, W).reshape(1, W * Cmid).astype(jnp.float32)
    bias2_t = jnp.tile(bias2, W).reshape(1, W * Cout).astype(jnp.float32)

    in_specs = [
        pl.BlockSpec((None, None, TH + 4, (W + 2) * Cin),
                     lambda n, t: (n, t, 0, 0)),
        pl.BlockSpec((3, (W + 2) * Cin, W * Cmid), lambda n, t: (0, 0, 0)),
        pl.BlockSpec((1, W * Cmid), lambda n, t: (0, 0)),
        pl.BlockSpec((3, W * Cmid, W * Cout), lambda n, t: (0, 0, 0)),
        pl.BlockSpec((1, W * Cout), lambda n, t: (0, 0)),
    ]
    operands = [slabs, band1, bias1_t, band2, bias2_t]
    if add:                                                # residual tile input
        operands.append(xb.reshape(N, H, W * Cin))
        in_specs.append(pl.BlockSpec((None, TH, W * Cin),
                                     lambda n, t: (n, t, 0)))

    kernel = functools.partial(_sbottleneck_kernel, H=H, TH=TH, add=add)

    out = pl.pallas_call(
        kernel,
        out_shape=jax.ShapeDtypeStruct((N, H, W * Cout), jnp.float32),
        grid=(N, T),
        in_specs=in_specs,
        out_specs=pl.BlockSpec((None, TH, W * Cout), lambda n, t: (n, t, 0)),
        scratch_shapes=[pltpu.VMEM((TH + 2, W * Cmid), jnp.bfloat16)],
        compiler_params=pltpu.CompilerParams(
            dimension_semantics=("parallel", "parallel")),
    )(*operands)
    return out.reshape(N, H, W, Cout)


# ---------------------------------------------- parameters (deterministic init)

def _fold_bn(w, gamma, beta, mean, var, eps=1e-5):
    scale = gamma / jnp.sqrt(var + eps)              # (Cout,)
    return w * scale, beta - mean * scale            # broadcast over trailing Cout


def _make_conv_params(key, w_shape, cout):
    kw, kg, kb, km, kv = jax.random.split(key, 5)
    w = jax.random.normal(kw, w_shape, jnp.float32) * 0.1
    gamma = jax.random.uniform(kg, (cout,), jnp.float32, 0.5, 1.5)
    beta = jax.random.normal(kb, (cout,), jnp.float32) * 0.1
    mean = jax.random.normal(km, (cout,), jnp.float32) * 0.1
    var = jax.random.uniform(kv, (cout,), jnp.float32, 0.5, 1.5)
    return _fold_bn(w, gamma, beta, mean, var)


def _band_weights(w, W, pad_in):
    """w: (3,3,Cin,Cout) dense (BN-folded) weights -> (3, (W+2*pad_in)*Cin, W*Cout)
    per-kh block-Toeplitz matrices acting on a [col, channel]-flattened row.
    pad_in=1: input row carries explicit zero cols; pad_in=0: zero padding is
    realised by truncating the band (used for cv2's intermediate)."""
    w = np.asarray(w)
    _, _, Cin, Cout = w.shape
    Win = W + 2 * pad_in
    B = np.zeros((3, Win * Cin, W * Cout), np.float32)
    for kh in range(3):
        for kw in range(3):
            for c in range(W):
                ci = c - 1 + kw + pad_in
                if 0 <= ci < Win:
                    B[kh, ci * Cin:(ci + 1) * Cin,
                      c * Cout:(c + 1) * Cout] = w[kh, kw]
    return jnp.asarray(B)


# ----------------------------------------------------------------- the module

class SBottleneckATPallas:
    """SBottleneck_AT, standard-Conv path (spk_conv_li contains neither 0 nor 1):
    cv1 = Conv(c1, c_, 3, 1); cv2 = Conv(c_, c2, 3, 1); out = x + cv2(cv1(x)) if add.
    """
    # TODO(synk): SConv_AT (spiking-conv) branches and the calculation_li
    # bookkeeping have no numeric effect on this forward pass and are omitted.

    def __init__(self, c1, c2, spk_conv_li=(), shortcut=True, calculation=False,
                 g=1, k=(3, 3), e=0.5, *, key, tile_h=8):
        if 0 in spk_conv_li or 1 in spk_conv_li:
            raise NotImplementedError("SConv_AT (spiking) branch not implemented")
        assert g == 1 and tuple(k) == (3, 3), "only g=1, k=(3,3) implemented"
        c_ = int(c2 * e)
        self.add = bool(shortcut) and (c1 == c2)
        self.tile_h = tile_h
        k1, k2 = jax.random.split(key)
        self.w1, self.b1 = _make_conv_params(k1, (3, 3, c1, c_), c_)
        self.w2, self.b2 = _make_conv_params(k2, (3, 3, c_, c2), c2)
        self._band_cache = {}
        self.calculation_li = []

    def _bands(self, W):
        if W not in self._band_cache:
            self._band_cache[W] = (
                _band_weights(self.w1, W, pad_in=1).astype(jnp.bfloat16),
                _band_weights(self.w2, W, pad_in=0).astype(jnp.bfloat16))
        return self._band_cache[W]

    def __call__(self, x_nchw):
        x = jnp.transpose(x_nchw, (0, 2, 3, 1))               # NCHW -> NHWC
        band1, band2 = self._bands(x.shape[2])
        out = sbottleneck_pallas(x, band1, self.b1, band2, self.b2,
                                 add=self.add, tile_h=self.tile_h)
        self.calculation_li = []
        return jnp.transpose(out, (0, 3, 1, 2))               # NHWC -> NCHW


# --------------------------------------------------------- pure-JAX reference

def _ref_forward(x_nchw, w1, b1, w2, b2, add):
    def conv_bn_silu(x, w, b):
        y = lax.conv_general_dilated(x, w, (1, 1), "SAME",
                                     dimension_numbers=("NCHW", "HWIO", "NCHW"))
        y = y + b.reshape(1, -1, 1, 1)
        return y * jax.nn.sigmoid(y)
    y = conv_bn_silu(conv_bn_silu(x_nchw, w1, b1), w2, b2)
    return x_nchw + y if add else y


if __name__ == "__main__":
    key = jax.random.PRNGKey(0)
    kx, kp = jax.random.split(key)

    c1 = c2 = 8
    N, H, W = 2, 16, 16
    x = jax.random.normal(kx, (N, c1, H, W), jnp.float32)     # NCHW like PyTorch

    model = SBottleneckATPallas(c1, c2, spk_conv_li=(), shortcut=True, e=0.5,
                                key=kp, tile_h=8)
    out = jax.block_until_ready(model(x))

    assert out.shape == (N, c2, H, W), out.shape
    assert bool(jnp.isfinite(out).all())

    # loose tolerance: bf16 matmul inputs + approximate EUP reciprocal
    ref = _ref_forward(x, model.w1, model.b1, model.w2, model.b2, model.add)
    err = float(jnp.max(jnp.abs(out - ref)))
    assert err < 0.15, f"max abs err {err}"

    print("KERNEL_OK")
</pallas_src>

<mosaic_0001>
module attributes {stable_mosaic.version = 11 : i64} {
  func.func @_sbottleneck_kernel(%arg0: i32, %arg1: i32, %arg2: memref<1x1x12x144xbf16, #tpu.memory_space<vmem>>, %arg3: memref<3x144x64xbf16, #tpu.memory_space<vmem>>, %arg4: memref<1x64xf32, #tpu.memory_space<vmem>>, %arg5: memref<3x64x128xbf16, #tpu.memory_space<vmem>>, %arg6: memref<1x128xf32, #tpu.memory_space<vmem>>, %arg7: memref<1x8x128xbf16, #tpu.memory_space<vmem>>, %arg8: memref<1x8x128xf32, #tpu.memory_space<vmem>>, %arg9: memref<10x64xbf16, #tpu.memory_space<vmem>>) attributes {dimension_semantics = [#tpu.dimension_semantics<parallel>, #tpu.dimension_semantics<parallel>], iteration_bounds = array<i64: 2, 2>, scalar_prefetch = 0 : i64, scratch_operands = 1 : i64, tpu.core_type = #tpu.core_type<tc>, window_params = [{transform_indices = @transform_0, window_bounds = array<i64: 1, 1, 12, 144>}, {pipeline_mode = #tpu.pipeline_mode<synchronous>, transform_indices = @transform_1, window_bounds = array<i64: 3, 144, 64>}, {pipeline_mode = #tpu.pipeline_mode<synchronous>, transform_indices = @transform_2, window_bounds = array<i64: 1, 64>}, {pipeline_mode = #tpu.pipeline_mode<synchronous>, transform_indices = @transform_3, window_bounds = array<i64: 3, 64, 128>}, {pipeline_mode = #tpu.pipeline_mode<synchronous>, transform_indices = @transform_4, window_bounds = array<i64: 1, 128>}, {transform_indices = @transform_5, window_bounds = array<i64: 1, 8, 128>}, {transform_indices = @transform_6, window_bounds = array<i64: 1, 8, 128>}]} {
    %cst = arith.constant 0.000000e+00 : f32
    %0 = vector.broadcast %cst : f32 to vector<10x64xf32>
    %c0 = arith.constant 0 : index
    %c0_0 = arith.constant 0 : index
    %c0_1 = arith.constant 0 : index
    %c0_2 = arith.constant 0 : index
    %1 = vector.load %arg2[%c0, %c0_0, %c0_1, %c0_2] : memref<1x1x12x144xbf16, #tpu.memory_space<vmem>>, vector<1x1x10x144xbf16>
    %2 = vector.shape_cast %1 : vector<1x1x10x144xbf16> to vector<10x144xbf16>
    %c0_3 = arith.constant 0 : index
    %c0_4 = arith.constant 0 : index
    %c0_5 = arith.constant 0 : index
    %3 = vector.load %arg3[%c0_3, %c0_4, %c0_5] : memref<3x144x64xbf16, #tpu.memory_space<vmem>>, vector<1x144x64xbf16>
    %4 = vector.shape_cast %3 : vector<1x144x64xbf16> to vector<144x64xbf16>
    %cst_6 = arith.constant dense<0.000000e+00> : vector<10x64xf32>
    %5 = tpu.matmul %2, %4, %cst_6 {dimension_numbers = #tpu.dot_dimension_numbers<[1], [0], [0], [1], [0, 0, 1, 1], [], []>} : vector<10x144xbf16>, vector<144x64xbf16>, vector<10x64xf32> -> vector<10x64xf32>
    %6 = arith.addf %0, %5 : vector<10x64xf32>
    %c0_7 = arith.constant 0 : index
    %c0_8 = arith.constant 0 : index
    %c1 = arith.constant 1 : index
    %c0_9 = arith.constant 0 : index
    %7 = vector.load %arg2[%c0_7, %c0_8, %c1, %c0_9] : memref<1x1x12x144xbf16, #tpu.memory_space<vmem>>, vector<1x1x10x144xbf16>
    %8 = vector.shape_cast %7 : vector<1x1x10x144xbf16> to vector<10x144xbf16>
    %c1_10 = arith.constant 1 : index
    %c0_11 = arith.constant 0 : index
    %c0_12 = arith.constant 0 : index
    %9 = vector.load %arg3[%c1_10, %c0_11, %c0_12] : memref<3x144x64xbf16, #tpu.memory_space<vmem>>, vector<1x144x64xbf16>
    %10 = vector.shape_cast %9 : vector<1x144x64xbf16> to vector<144x64xbf16>
    %cst_13 = arith.constant dense<0.000000e+00> : vector<10x64xf32>
    %11 = tpu.matmul %8, %10, %cst_13 {dimension_numbers = #tpu.dot_dimension_numbers<[1], [0], [0], [1], [0, 0, 1, 1], [], []>} : vector<10x144xbf16>, vector<144x64xbf16>, vector<10x64xf32> -> vector<10x64xf32>
    %12 = arith.addf %6, %11 : vector<10x64xf32>
    %c0_14 = arith.constant 0 : index
    %c0_15 = arith.constant 0 : index
    %c2 = arith.constant 2 : index
    %c0_16 = arith.constant 0 : index
    %13 = vector.load %arg2[%c0_14, %c0_15, %c2, %c0_16] : memref<1x1x12x144xbf16, #tpu.memory_space<vmem>>, vector<1x1x10x144xbf16>
    %14 = vector.shape_cast %13 : vector<1x1x10x144xbf16> to vector<10x144xbf16>
    %c2_17 = arith.constant 2 : index
    %c0_18 = arith.constant 0 : index
    %c0_19 = arith.constant 0 : index
    %15 = vector.load %arg3[%c2_17, %c0_18, %c0_19] : memref<3x144x64xbf16, #tpu.memory_space<vmem>>, vector<1x144x64xbf16>
    %16 = vector.shape_cast %15 : vector<1x144x64xbf16> to vector<144x64xbf16>
    %cst_20 = arith.constant dense<0.000000e+00> : vector<10x64xf32>
    %17 = tpu.matmul %14, %16, %cst_20 {dimension_numbers = #tpu.dot_dimension_numbers<[1], [0], [0], [1], [0, 0, 1, 1], [], []>} : vector<10x144xbf16>, vector<144x64xbf16>, vector<10x64xf32> -> vector<10x64xf32>
    %18 = arith.addf %12, %17 : vector<10x64xf32>
    %c0_21 = arith.constant 0 : index
    %c0_22 = arith.constant 0 : index
    %19 = vector.load %arg4[%c0_21, %c0_22] : memref<1x64xf32, #tpu.memory_space<vmem>>, vector<1x64xf32>
    %20 = vector.broadcast %19 : vector<1x64xf32> to vector<10x64xf32>
    %21 = arith.addf %18, %20 : vector<10x64xf32>
    %cst_23 = arith.constant 0.000000e+00 : f32
    %22 = vector.broadcast %cst_23 : f32 to vector<10x64xf32>
    %23 = arith.subf %22, %21 : vector<10x64xf32>
    %24 = math.exp %23 : vector<10x64xf32>
    %cst_24 = arith.constant 1.000000e+00 : f32
    %25 = vector.broadcast %cst_24 : f32 to vector<10x64xf32>
    %26 = arith.addf %25, %24 : vector<10x64xf32>
    %27 = tpu.reciprocal %26 {approx = true} : vector<10x64xf32> -> vector<10x64xf32>
    %28 = arith.mulf %21, %27 : vector<10x64xf32>
    %c8_i32 = arith.constant 8 : i32
    %29 = arith.muli %arg1, %c8_i32 : i32
    %c1_i32 = arith.constant 1 : i32
    %30 = arith.subi %29, %c1_i32 : i32
    %31 = tpu.iota {dimensions = array<i32: 0>} : vector<10x64xi32>
    %32 = vector.broadcast %30 : i32 to vector<10x64xi32>
    %33 = arith.addi %32, %31 : vector<10x64xi32>
    %c0_i32 = arith.constant 0 : i32
    %34 = vector.broadcast %c0_i32 : i32 to vector<10x64xi32>
    %35 = arith.cmpi sge, %33, %34 : vector<10x64xi32>
    %c16_i32 = arith.constant 16 : i32
    %36 = vector.broadcast %c16_i32 : i32 to vector<10x64xi32>
    %37 = arith.cmpi slt, %33, %36 : vector<10x64xi32>
    %38 = arith.andi %35, %37 : vector<10x64xi1>
    %cst_25 = arith.constant 0.000000e+00 : f32
    %39 = vector.broadcast %cst_25 : f32 to vector<10x64xf32>
    %40 = arith.select %38, %28, %39 : vector<10x64xi1>, vector<10x64xf32>
    %41 = arith.truncf %40 : vector<10x64xf32> to vector<10x64xbf16>
    %c0_26 = arith.constant 0 : index
    %c0_27 = arith.constant 0 : index
    %42 = vector.load %arg9[%c0_26, %c0_27] : memref<10x64xbf16, #tpu.memory_space<vmem>>, vector<10x64xbf16>
    tpu.vector_store %arg9[%c0_26, %c0_27], %41 {strides = array<i32>} : memref<10x64xbf16, #tpu.memory_space<vmem>>, vector<10x64xbf16>,
    %cst_28 = arith.constant 0.000000e+00 : f32
    %43 = vector.broadcast %cst_28 : f32 to vector<8x128xf32>
    %c0_29 = arith.constant 0 : index
    %c0_30 = arith.constant 0 : index
    %44 = vector.load %arg9[%c0_29, %c0_30] : memref<10x64xbf16, #tpu.memory_space<vmem>>, vector<8x64xbf16>
    %c0_31 = arith.constant 0 : index
    %c0_32 = arith.constant 0 : index
    %c0_33 = arith.constant 0 : index
    %45 = vector.load %arg5[%c0_31, %c0_32, %c0_33] : memref<3x64x128xbf16, #tpu.memory_space<vmem>>, vector<1x64x128xbf16>
    %46 = vector.shape_cast %45 : vector<1x64x128xbf16> to vector<64x128xbf16>
    %cst_34 = arith.constant dense<0.000000e+00> : vector<8x128xf32>
    %47 = tpu.matmul %44, %46, %cst_34 {dimension_numbers = #tpu.dot_dimension_numbers<[1], [0], [0], [1], [0, 0, 1, 1], [], []>} : vector<8x64xbf16>, vector<64x128xbf16>, vector<8x128xf32> -> vector<8x128xf32>
    %48 = arith.addf %43, %47 : vector<8x128xf32>
    %c1_35 = arith.constant 1 : index
    %c0_36 = arith.constant 0 : index
    %49 = vector.load %arg9[%c1_35, %c0_36] : memref<10x64xbf16, #tpu.memory_space<vmem>>, vector<8x64xbf16>
    %c1_37 = arith.constant 1 : index
    %c0_38 = arith.constant 0 : index
    %c0_39 = arith.constant 0 : index
    %50 = vector.load %arg5[%c1_37, %c0_38, %c0_39] : memref<3x64x128xbf16, #tpu.memory_space<vmem>>, vector<1x64x128xbf16>
    %51 = vector.shape_cast %50 : vector<1x64x128xbf16> to vector<64x128xbf16>
    %cst_40 = arith.constant dense<0.000000e+00> : vector<8x128xf32>
    %52 = tpu.matmul %49, %51, %cst_40 {dimension_numbers = #tpu.dot_dimension_numbers<[1], [0], [0], [1], [0, 0, 1, 1], [], []>} : vector<8x64xbf16>, vector<64x128xbf16>, vector<8x128xf32> -> vector<8x128xf32>
    %53 = arith.addf %48, %52 : vector<8x128xf32>
    %c2_41 = arith.constant 2 : index
    %c0_42 = arith.constant 0 : index
    %54 = vector.load %arg9[%c2_41, %c0_42] : memref<10x64xbf16, #tpu.memory_space<vmem>>, vector<8x64xbf16>
    %c2_43 = arith.constant 2 : index
    %c0_44 = arith.constant 0 : index
    %c0_45 = arith.constant 0 : index
    %55 = vector.load %arg5[%c2_43, %c0_44, %c0_45] : memref<3x64x128xbf16, #tpu.memory_space<vmem>>, vector<1x64x128xbf16>
    %56 = vector.shape_cast %55 : vector<1x64x128xbf16> to vector<64x128xbf16>
    %cst_46 = arith.constant dense<0.000000e+00> : vector<8x128xf32>
    %57 = tpu.matmul %54, %56, %cst_46 {dimension_numbers = #tpu.dot_dimension_numbers<[1], [0], [0], [1], [0, 0, 1, 1], [], []>} : vector<8x64xbf16>, vector<64x128xbf16>, vector<8x128xf32> -> vector<8x128xf32>
    %58 = arith.addf %53, %57 : vector<8x128xf32>
    %c0_47 = arith.constant 0 : index
    %c0_48 = arith.constant 0 : index
    %59 = vector.load %arg6[%c0_47, %c0_48] : memref<1x128xf32, #tpu.memory_space<vmem>>, vector<1x128xf32>
    %60 = vector.broadcast %59 : vector<1x128xf32> to vector<8x128xf32>
    %61 = arith.addf %58, %60 : vector<8x128xf32>
    %cst_49 = arith.constant 0.000000e+00 : f32
    %62 = vector.broadcast %cst_49 : f32 to vector<8x128xf32>
    %63 = arith.subf %62, %61 : vector<8x128xf32>
    %64 = math.exp %63 : vector<8x128xf32>
    %cst_50 = arith.constant 1.000000e+00 : f32
    %65 = vector.broadcast %cst_50 : f32 to vector<8x128xf32>
    %66 = arith.addf %65, %64 : vector<8x128xf32>
    %67 = tpu.reciprocal %66 {approx = true} : vector<8x128xf32> -> vector<8x128xf32>
    %68 = arith.mulf %61, %67 : vector<8x128xf32>
    %c0_51 = arith.constant 0 : index
    %c0_52 = arith.constant 0 : index
    %c0_53 = arith.constant 0 : index
    %69 = vector.load %arg7[%c0_51, %c0_52, %c0_53] : memref<1x8x128xbf16, #tpu.memory_space<vmem>>, vector<1x8x128xbf16>
    %70 = vector.shape_cast %69 : vector<1x8x128xbf16> to vector<8x128xbf16>
    %71 = arith.extf %70 : vector<8x128xbf16> to vector<8x128xf32>
    %72 = arith.addf %68, %71 : vector<8x128xf32>
    %c0_54 = arith.constant 0 : index
    %c0_55 = arith.constant 0 : index
    %c0_56 = arith.constant 0 : index
    %73 = vector.load %arg8[%c0_54, %c0_55, %c0_56] : memref<1x8x128xf32, #tpu.memory_space<vmem>>, vector<1x8x128xf32>
    %74 = vector.shape_cast %73 : vector<1x8x128xf32> to vector<8x128xf32>
    %75 = vector.shape_cast %72 : vector<8x128xf32> to vector<1x8x128xf32>
    tpu.vector_store %arg8[%c0_54, %c0_55, %c0_56], %75 {strides = array<i32>} : memref<1x8x128xf32, #tpu.memory_space<vmem>>, vector<1x8x128xf32>,
    return
  }
  func.func @transform_0(%arg0: i32, %arg1: i32) -> (i32, i32, i32, i32) {
    %c0_i32 = arith.constant 0 : i32
    %c0_i32_0 = arith.constant 0 : i32
    %c0_i32_1 = arith.constant 0 : i32
    return %arg0, %arg1, %c0_i32, %c0_i32_0 : i32, i32, i32, i32
  }
  func.func @transform_1(%arg0: i32, %arg1: i32) -> (i32, i32, i32) {
    %c0_i32 = arith.constant 0 : i32
    %c0_i32_0 = arith.constant 0 : i32
    %c0_i32_1 = arith.constant 0 : i32
    %c0_i32_2 = arith.constant 0 : i32
    return %c0_i32, %c0_i32_0, %c0_i32_1 : i32, i32, i32
  }
  func.func @transform_2(%arg0: i32, %arg1: i32) -> (i32, i32) {
    %c0_i32 = arith.constant 0 : i32
    %c0_i32_0 = arith.constant 0 : i32
    %c0_i32_1 = arith.constant 0 : i32
    return %c0_i32, %c0_i32_0 : i32, i32
  }
  func.func @transform_3(%arg0: i32, %arg1: i32) -> (i32, i32, i32) {
    %c0_i32 = arith.constant 0 : i32
    %c0_i32_0 = arith.constant 0 : i32
    %c0_i32_1 = arith.constant 0 : i32
    %c0_i32_2 = arith.constant 0 : i32
    return %c0_i32, %c0_i32_0, %c0_i32_1 : i32, i32, i32
  }
  func.func @transform_4(%arg0: i32, %arg1: i32) -> (i32, i32) {
    %c0_i32 = arith.constant 0 : i32
    %c0_i32_0 = arith.constant 0 : i32
    %c0_i32_1 = arith.constant 0 : i32
    return %c0_i32, %c0_i32_0 : i32, i32
  }
  func.func @transform_5(%arg0: i32, %arg1: i32) -> (i32, i32, i32) {
    %c0_i32 = arith.constant 0 : i32
    %c0_i32_0 = arith.constant 0 : i32
    return %arg0, %arg1, %c0_i32 : i32, i32, i32
  }
  func.func @transform_6(%arg0: i32, %arg1: i32) -> (i32, i32, i32) {
    %c0_i32 = arith.constant 0 : i32
    %c0_i32_0 = arith.constant 0 : i32
    return %arg0, %arg1, %c0_i32 : i32, i32, i32
  }
}

</mosaic_0001>

<llo_original>
// kernel: tpu_custom_call.1
$region0: #{tpu_custom_call.1}
  #allocation0 [shape = 'u32[]', space=smem, size = 0x4, offset = 0x4, fixed_abs, tag = 'smem constant byte address 0x4 - core index']
  #allocation1 [shape = 'u32[144,128]{1,0:T(1,128)}', space=vmem, size = 0x12000, scoped, tag = 'internal scratch']
  #allocation2 [shape = 'bf16[10,64]{1,0:T(8,128)(2,1)}', space=vmem, size = 0x1000, scoped, tag = 'scratch operand']
  %s0 = inlined_call_operand.vmem [shape: bf16[2,2,12,144], index: 0, kind: input, shape index: {}]
  %s1 = inlined_call_operand.vmem [shape: bf16[3,144,64], index: 1, kind: input, shape index: {}]
  %s2 = inlined_call_operand.vmem [shape: f32[1,64], index: 2, kind: input, shape index: {}]
  %s3 = inlined_call_operand.vmem [shape: bf16[3,64,128], index: 3, kind: input, shape index: {}]
  %s4 = inlined_call_operand.vmem [shape: f32[1,128], index: 4, kind: input, shape index: {}]
  %s5 = inlined_call_operand.vmem [shape: bf16[2,16,128], index: 5, kind: input, shape index: {}]
  %s6 = inlined_call_operand.hbm [shape: f32[2,16,128], index: 6, kind: output, shape index: {}]
  %s7 = sld [smem:[#allocation0]]
  $region57: #{tpu_custom_call.1} parent=0
    _
  %s9 = ssub.s32 1, %s7
  %s10 = scalar_select 0, %s9, %s7
  $region1: #{tpu_custom_call.1} parent=0
    #allocation3 [shape = 'u8[8192]{0}', space=vmem, size = 0x2000, scoped, tag = 'output window, operand 0']
    #allocation4 [shape = 's32[2]{0}', space=sflag, size = 0x8, scoped, tag = 'scoped memory for tpu_custom_call.1']
    %11 = vsyncpa [#allocation4], 0
    %s12 = scalar_lea.sflag [#allocation4], 1
    %13 = vsyncpa %s12, 0
    loop: start=0, step=1, limit=6
    $region2: #{tpu_custom_call.1} parent=1 // loop_pre_header
      _
    $region3: #{tpu_custom_call.1} parent=1 // loop_header
      %s15 = sphi 0, %s19
      %p16 = scmp.ge.s32.totalorder %s15, 6
      %s22 = sphi 0, %s34
      %s23 = sphi 0, %s30
      %s24 = sphi 0, %s22
      %s25 = sphi 0, %s23
      %s26 = sphi 0, %s24
      %s27 = sphi 0, %s25
      %s39 = sphi 0, %s41
      %s42 = sphi 0, %s39
      %s43 = sphi 0, %s42
      %s59 = sphi 0, %s43
      %s63 = sphi 0, %s63
      %s65 = sphi 0, %s63
      %s66 = sphi 0, %s65
      %s80 = sphi 0, %s66
      %s84 = sphi 0, %s84
      %s86 = sphi 0, %s84
      %s87 = sphi 0, %s86
      %s101 = sphi 0, %s87
      %s105 = sphi 0, %s105
      %s107 = sphi 0, %s105
      %s108 = sphi 0, %s107
      %s122 = sphi 0, %s108
      %s126 = sphi 0, %s126
      %s128 = sphi 0, %s126
      %s129 = sphi 0, %s128
      %s143 = sphi 0, %s129
      %s151 = sphi 0, %s153
      %s154 = sphi 0, %s151
      %s155 = sphi 0, %s154
      %s171 = sphi 0, %s155
      %s179 = sphi 0, %s181
      %s182 = sphi 0, %s179
      %s183 = sphi 0, %s182
      %s199 = sphi 0, %s183
    $region4: #{tpu_custom_call.1} parent=1 // loop_header_branch
      %18 = sbr.rel (%p16) target = $region8
    $region5: #{tpu_custom_call.1} parent=1 // loop_body
      %s20 = ssub.s32 %s15, 1
      %s21 = ssub.s32 %s15, 2
      %s28 = sadd.s32 1, %s23
      %p29 = scmp.ge.s32.totalorder %s28, 2
      %s30 = scalar_select %p29, 0, %s28
      %s31 = sadd.s32 1, %s22
      %s32 = scalar_select %p29, %s31, %s22
      %p33 = scmp.ge.s32.totalorder %s32, 2
      %s34 = scalar_select %p33, 0, %s32
      %s35 = ssub.s32 %s22, %s34
      %s36 = ssub.s32 %s23, %s30
      %s37 = sor.u32 %s35, %s36
      %p38 = scmp.eq.s32.totalorder %s37, 0
      %s40 = sadd.s32 %s39, 1
      %s41 = scalar_select %p38, %s39, %s40
      %p44 = pneg %p38
      %p45 = scmp.eq.s32.totalorder %s15, 3
      %p46 = por %p44, %p45
      %p47 = scmp.ne.s32.totalorder %s39, %s42
      %p48 = scmp.eq.s32.totalorder %s15, 0
      %p49 = por %p47, %p48
      %p50 = scmp.ne.s32.totalorder %s39, %s42
      %p51 = scmp.eq.s32.totalorder %s20, 3
      %p52 = por %p50, %p51
      %p53 = scmp.ne.s32.totalorder %s42, %s43
      %p54 = scmp.eq.s32.totalorder %s20, 0
      %p55 = por %p53, %p54
      %p56 = scmp.ne.s32.totalorder %s42, %s43
      %p57 = scmp.eq.s32.totalorder %s21, 3
      %p58 = por %p56, %p57
      %p60 = scmp.ne.s32.totalorder %s43, %s59
      %p61 = scmp.eq.s32.totalorder %s21, 0
      %p62 = por %p60, %p61
      %s64 = sadd.s32 %s63, 1
      %p67 = scmp.eq.s32.totalorder %s15, 3
      %p68 = scmp.ne.s32.totalorder %s63, %s65
      %p69 = scmp.eq.s32.totalorder %s15, 0
      %p70 = por %p68, %p69
      %p71 = scmp.ne.s32.totalorder %s63, %s65
      %p72 = scmp.eq.s32.totalorder %s20, 3
      %p73 = por %p71, %p72
      %p74 = scmp.ne.s32.totalorder %s65, %s66
      %p75 = scmp.eq.s32.totalorder %s20, 0
      %p76 = por %p74, %p75
      %p77 = scmp.ne.s32.totalorder %s65, %s66
      %p78 = scmp.eq.s32.totalorder %s21, 3
      %p79 = por %p77, %p78
      %p81 = scmp.ne.s32.totalorder %s66, %s80
      %p82 = scmp.eq.s32.totalorder %s21, 0
      %p83 = por %p81, %p82
      %s85 = sadd.s32 %s84, 1
      %p88 = scmp.eq.s32.totalorder %s15, 3
      %p89 = scmp.ne.s32.totalorder %s84, %s86
      %p90 = scmp.eq.s32.totalorder %s15, 0
      %p91 = por %p89, %p90
      %p92 = scmp.ne.s32.totalorder %s84, %s86
      %p93 = scmp.eq.s32.totalorder %s20, 3
      %p94 = por %p92, %p93
      %p95 = scmp.ne.s32.totalorder %s86, %s87
      %p96 = scmp.eq.s32.totalorder %s20, 0
      %p97 = por %p95, %p96
      %p98 = scmp.ne.s32.totalorder %s86, %s87
      %p99 = scmp.eq.s32.totalorder %s21, 3
      %p100 = por %p98, %p99
      %p102 = scmp.ne.s32.totalorder %s87, %s101
      %p103 = scmp.eq.s32.totalorder %s21, 0
      %p104 = por %p102, %p103
      %s106 = sadd.s32 %s105, 1
      %p109 = scmp.eq.s32.totalorder %s15, 3
      %p110 = scmp.ne.s32.totalorder %s105, %s107
      %p111 = scmp.eq.s32.totalorder %s15, 0
      %p112 = por %p110, %p111
      %p113 = scmp.ne.s32.totalorder %s105, %s107
      %p114 = scmp.eq.s32.totalorder %s20, 3
      %p115 = por %p113, %p114
      %p116 = scmp.ne.s32.totalorder %s107, %s108
      %p117 = scmp.eq.s32.totalorder %s20, 0
      %p118 = por %p116, %p117
      %p119 = scmp.ne.s32.totalorder %s107, %s108
      %p120 = scmp.eq.s32.totalorder %s21, 3
      %p121 = por %p119, %p120
      %p123 = scmp.ne.s32.totalorder %s108, %s122
      %p124 = scmp.eq.s32.totalorder %s21, 0
      %p125 = por %p123, %p124
      %s127 = sadd.s32 %s126, 1
      %p130 = scmp.eq.s32.totalorder %s15, 3
      %p131 = scmp.ne.s32.totalorder %s126, %s128
      %p132 = scmp.eq.s32.totalorder %s15, 0
      %p133 = por %p131, %p132
      %p134 = scmp.ne.s32.totalorder %s126, %s128
      %p135 = scmp.eq.s32.totalorder %s20, 3
      %p136 = por %p134, %p135
      %p137 = scmp.ne.s32.totalorder %s128, %s129
      %p138 = scmp.eq.s32.totalorder %s20, 0
      %p139 = por %p137, %p138
      %p140 = scmp.ne.s32.totalorder %s128, %s129
      %p141 = scmp.eq.s32.totalorder %s21, 3
      %p142 = por %p140, %p141
      %p144 = scmp.ne.s32.totalorder %s129, %s143
      %p145 = scmp.eq.s32.totalorder %s21, 0
      %p146 = por %p144, %p145
      %s147 = ssub.s32 %s22, %s34
      %s148 = ssub.s32 %s23, %s30
      %s149 = sor.u32 %s147, %s148
      %p150 = scmp.eq.s32.totalorder %s149, 0
      %s152 = sadd.s32 %s151, 1
      %s153 = scalar_select %p150, %s151, %s152
      %p156 = pneg %p150
      %p157 = scmp.eq.s32.totalorder %s15, 3
      %p158 = por %p156, %p157
      %p159 = scmp.ne.s32.totalorder %s151, %s154
      %p160 = scmp.eq.s32.totalorder %s15, 0
      %p161 = por %p159, %p160
      %p162 = scmp.ne.s32.totalorder %s151, %s154
      %p163 = scmp.eq.s32.totalorder %s20, 3
      %p164 = por %p162, %p163
      %p165 = scmp.ne.s32.totalorder %s154, %s155
      %p166 = scmp.eq.s32.totalorder %s20, 0
      %p167 = por %p165, %p166
      %p168 = scmp.ne.s32.totalorder %s154, %s155
      %p169 = scmp.eq.s32.totalorder %s21, 3
      %p170 = por %p168, %p169
      %p172 = scmp.ne.s32.totalorder %s155, %s171
      %p173 = scmp.eq.s32.totalorder %s21, 0
      %p174 = por %p172, %p173
      %s175 = ssub.s32 %s22, %s34
      %s176 = ssub.s32 %s23, %s30
      %s177 = sor.u32 %s175, %s176
      %p178 = scmp.eq.s32.totalorder %s177, 0
      %s180 = sadd.s32 %s179, 1
      %s181 = scalar_select %p178, %s179, %s180
      %p184 = pneg %p178
      %p185 = scmp.eq.s32.totalorder %s15, 3
      %p186 = por %p184, %p185
      %p187 = scmp.ne.s32.totalorder %s179, %s182
      %p188 = scmp.eq.s32.totalorder %s15, 0
      %p189 = por %p187, %p188
      %p190 = scmp.ne.s32.totalorder %s179, %s182
      %p191 = scmp.eq.s32.totalorder %s20, 3
      %p192 = por %p190, %p191
      %p193 = scmp.ne.s32.totalorder %s182, %s183
      %p194 = scmp.eq.s32.totalorder %s20, 0
      %p195 = por %p193, %p194
      %p196 = scmp.ne.s32.totalorder %s182, %s183
      %p197 = scmp.eq.s32.totalorder %s21, 3
      %p198 = por %p196, %p197
      %p200 = scmp.ne.s32.totalorder %s183, %s199
      %p201 = scmp.eq.s32.totalorder %s21, 0
      %p202 = por %p200, %p201
      %p203 = scmp.le.s32.totalorder 1, %s15
      %p204 = scmp.lt.s32.totalorder %s15, 5
      %p205 = pnand %p203, %p204
      %p206 = pneg %p205
      // Predicated region
      $region9: #{tpu_custom_call.1} parent=5 // pred_check
        _
      $region10: #{tpu_custom_call.1} parent=5 // pred_check_branch
        %208 = sbr.rel (%p205) target = $region12
      $region11: #{tpu_custom_call.1} parent=5 // pred_region
        %s209 = ssub.s32 %s15, 1
        // Predicated region
        $region13: #{tpu_custom_call.1} parent=11 // pred_check
          %p210 = pneg %p76
        $region14: #{tpu_custom_call.1} parent=11 // pred_check_branch
          %212 = sbr.rel (%p210) target = $region16
        $region15: #{tpu_custom_call.1} parent=11 // pred_region
          _
        $region16: #{tpu_custom_call.1} parent=11 // pred_fallthru
          _
        // Predicated region
        $region17: #{tpu_custom_call.1} parent=11 // pred_check
          %p213 = pneg %p97
        $region18: #{tpu_custom_call.1} parent=11 // pred_check_branch
          %215 = sbr.rel (%p213) target = $region20
        $region19: #{tpu_custom_call.1} parent=11 // pred_region
          _
        $region20: #{tpu_custom_call.1} parent=11 // pred_fallthru
          _
        // Predicated region
        $region21: #{tpu_custom_call.1} parent=11 // pred_check
          %p216 = pneg %p118
        $region22: #{tpu_custom_call.1} parent=11 // pred_check_branch
          %218 = sbr.rel (%p216) target = $region24
        $region23: #{tpu_custom_call.1} parent=11 // pred_region
          _
        $region24: #{tpu_custom_call.1} parent=11 // pred_fallthru
          _
        // Predicated region
        $region25: #{tpu_custom_call.1} parent=11 // pred_check
          %p219 = pneg %p139
        $region26: #{tpu_custom_call.1} parent=11 // pred_check_branch
          %221 = sbr.rel (%p219) target = $region28
        $region27: #{tpu_custom_call.1} parent=11 // pred_region
          _
        $region28: #{tpu_custom_call.1} parent=11 // pred_fallthru
          _
      $region12: #{tpu_custom_call.1} parent=5 // pred_fallthru
        _
      %p222 = scmp.lt.s32.totalorder %s15, 4
      // Predicated region
      $region29: #{tpu_custom_call.1} parent=5 // pred_check
        %p223 = pneg %p222
      $region30: #{tpu_custom_call.1} parent=5 // pred_check_branch
        %225 = sbr.rel (%p223) target = $region32
      $region31: #{tpu_custom_call.1} parent=5 // pred_region
        // Predicated region
        $region33: #{tpu_custom_call.1} parent=31 // pred_check
          %p226 = pneg %p49
        $region34: #{tpu_custom_call.1} parent=31 // pred_check_branch
          %228 = sbr.rel (%p226) target = $region36
        $region35: #{tpu_custom_call.1} parent=31 // pred_region
          %p229 = scmp.lt.s32.totalorder %s22, 1
          %s230 = scalar_select %p229, %s22, 1
          %p231 = scmp.lt.s32.totalorder %s23, 1
          %s232 = scalar_select %p231, %s23, 1
          %s233 = smul.addr %s232, 4
          %s234 = smul.addr %s230, 8
          %s235 = sadd.s32 %s233, %s234
          %s236 = smul.addr %s235, 4
          %s237 = scalar_lea.vmem %s0, %s236
        $region36: #{tpu_custom_call.1} parent=31 // pred_fallthru
          _
        // Predicated region
        $region37: #{tpu_custom_call.1} parent=31 // pred_check
          %p238 = pneg %p161
        $region38: #{tpu_custom_call.1} parent=31 // pred_check_branch
          %240 = sbr.rel (%p238) target = $region40
        $region39: #{tpu_custom_call.1} parent=31 // pred_region
          %p241 = scmp.lt.s32.totalorder %s22, 1
          %s242 = scalar_select %p241, %s22, 1
          %p243 = scmp.lt.s32.totalorder %s23, 1
          %s244 = scalar_select %p243, %s23, 1
          %s245 = smul.addr %s242, 2
          %s246 = sadd.s32 %s244, %s245
          %s247 = smul.addr %s246, 4
          %s248 = scalar_lea.vmem %s5, %s247
        $region40: #{tpu_custom_call.1} parent=31 // pred_fallthru
          _
      $region32: #{tpu_custom_call.1} parent=5 // pred_fallthru
        _
      %p249 = scmp.le.s32.totalorder 1, %s15
      %p250 = scmp.lt.s32.totalorder %s15, 5
      %p251 = pnand %p249, %p250
      %p252 = pneg %p251
      // Predicated region
      $region41: #{tpu_custom_call.1} parent=5 // pred_check
        _
      $region42: #{tpu_custom_call.1} parent=5 // pred_check_branch
        %254 = sbr.rel (%p251) target = $region44
      $region43: #{tpu_custom_call.1} parent=5 // pred_region
        %s255 = ssub.s32 %s15, 1
        %p256 = scmp.lt.s32.totalorder %s24, 1
        %s257 = scalar_select %p256, %s24, 1
        %p258 = scmp.lt.s32.totalorder %s25, 1
        %s259 = scalar_select %p258, %s25, 1
        %s260 = smul.addr %s259, 4
        %s261 = smul.addr %s257, 8
        %s262 = sadd.s32 %s260, %s261
        %s263 = smul.addr %s262, 4
        %s264 = scalar_lea.vmem %s0, %s263
        %p265 = pneg %p55
        %p266 = pneg %p52
        %p267 = pneg %p76
        %p268 = pneg %p73
        %p269 = pneg %p97
        %p270 = pneg %p94
        %p271 = pneg %p118
        %p272 = pneg %p115
        %p273 = pneg %p139
        %p274 = pneg %p136
        %p275 = scmp.lt.s32.totalorder %s24, 1
        %s276 = scalar_select %p275, %s24, 1
        %p277 = scmp.lt.s32.totalorder %s25, 1
        %s278 = scalar_select %p277, %s25, 1
        %s279 = smul.addr %s276, 2
        %s280 = sadd.s32 %s278, %s279
        %s281 = smul.addr %s280, 4
        %s282 = scalar_lea.vmem %s5, %s281
        %p283 = pneg %p167
        %p284 = pneg %p164
        %p285 = pneg %p195
        %p286 = pneg %p192
        %s287 = sand.u32 %s182, 1
        %s288 = scalar_lea.sflag [#allocation4], %s287
        %s289 = sand.u32 %s182, 1
        %s290 = smul.addr %s289, 8
        %s291 = scalar_lea.vmem [#allocation3], %s290
        %p292 = scmp.lt.s32.totalorder %s24, 1
        %s293 = scalar_select %p292, %s24, 1
        %p294 = scmp.lt.s32.totalorder %s25, 1
        %s295 = scalar_select %p294, %s25, 1
        %s296 = smul.addr %s295, 4
        %s297 = smul.addr %s293, 8
        %s298 = sadd.s32 %s296, %s297
        %s299 = smul.addr %s298, 4
        %s300 = scalar_lea.vmem %s0, %s299
        %p301 = scmp.lt.s32.totalorder %s24, 1
        %s302 = scalar_select %p301, %s24, 1
        %p303 = scmp.lt.s32.totalorder %s25, 1
        %s304 = scalar_select %p303, %s25, 1
        %s305 = smul.addr %s302, 2
        %s306 = sadd.s32 %s304, %s305
        %s307 = smul.addr %s306, 4
        %s308 = scalar_lea.vmem %s5, %s307
        %v310 = vld [vmem:[%s300] sm:$0xff]
        %v311 = vld [vmem:[%s300 + $0x8] sm:$0x11]
        %v312 = vld [vmem:[%s1] sm:$0xf]
        %v313 = vld [vmem:[%s1 + $0x4] sm:$0xf]
        %v314 = vld [vmem:[%s1 + $0x8] sm:$0xf]
        %v315 = vld [vmem:[%s1 + $0xc] sm:$0xf]
        %v316 = vld [vmem:[%s1 + $0x10] sm:$0xf]
        %v317 = vld [vmem:[%s1 + $0x14] sm:$0xf]
        %v318 = vld [vmem:[%s1 + $0x18] sm:$0xf]
        %v319 = vld [vmem:[%s1 + $0x1c] sm:$0xf]
        %v320 = vld [vmem:[%s1 + $0x20] sm:$0xf]
        %v321 = vld [vmem:[%s1 + $0x24] sm:$0xf]
        %v322 = vld [vmem:[%s1 + $0x28] sm:$0xf]
        %v323 = vld [vmem:[%s1 + $0x2c] sm:$0xf]
        %v324 = vld [vmem:[%s1 + $0x30] sm:$0xf]
        %v325 = vld [vmem:[%s1 + $0x34] sm:$0xf]
        %v326 = vld [vmem:[%s1 + $0x38] sm:$0xf]
        %v327 = vld [vmem:[%s1 + $0x3c] sm:$0xf]
        %v328 = vld [vmem:[%s1 + $0x40] sm:$0xf]
        %v329 = vld [vmem:[%s1 + $0x44] sm:$0xf]
        %v330 = vld [vmem:[%s300 + $0x8] sm:$0x33]
        %s331 = scalar_lea.vmem %s1, 72
        %v332 = vld [vmem:[%s331] sm:$0xf]
        %v333 = vld [vmem:[%s331 + $0x4] sm:$0xf]
        %v334 = vld [vmem:[%s331 + $0x8] sm:$0xf]
        %v335 = vld [vmem:[%s331 + $0xc] sm:$0xf]
        %v336 = vld [vmem:[%s331 + $0x10] sm:$0xf]
        %v337 = vld [vmem:[%s331 + $0x14] sm:$0xf]
        %v338 = vld [vmem:[%s331 + $0x18] sm:$0xf]
        %v339 = vld [vmem:[%s331 + $0x1c] sm:$0xf]
        %v340 = vld [vmem:[%s331 + $0x20] sm:$0xf]
        %v341 = vld [vmem:[%s331 + $0x24] sm:$0xf]
        %v342 = vld [vmem:[%s331 + $0x28] sm:$0xf]
        %v343 = vld [vmem:[%s331 + $0x2c] sm:$0xf]
        %v344 = vld [vmem:[%s331 + $0x30] sm:$0xf]
        %v345 = vld [vmem:[%s331 + $0x34] sm:$0xf]
        %v346 = vld [vmem:[%s331 + $0x38] sm:$0xf]
        %v347 = vld [vmem:[%s331 + $0x3c] sm:$0xf]
        %v348 = vld [vmem:[%s331 + $0x40] sm:$0xf]
        %v349 = vld [vmem:[%s331 + $0x44] sm:$0xf]
        %v352 = vunpack.c.l.b16 %v310
        %v353 = vunpack.c.h.b16 %v310
        %v354 = vunpack.c.l.b16 %v330
        %v355 = vunpack.c.h.b16 %v330
        %v356 = vpack.c.b16 %v354, %v352
        %v357 = vpack.c.b16 %v355, %v353
        %v359 = vshrl.u32 %v356, 16
        %v361 = vshll.u32 %v356, 16
        %v363 = vrot.slane %v361, 1
        %v364 = vor.u32 %v359, %v363
        %v366 = vshrl.u32 %v357, 16
        %v368 = vshll.u32 %v357, 16
        %v370 = vrot.slane %v368, 1
        %v371 = vor.u32 %v366, %v370
        %v391 = vunpack.c.l.b16 %v332
        %v392 = vunpack.c.l.b16 %v333
        %v393 = vunpack.c.l.b16 %v334
        %v394 = vunpack.c.l.b16 %v335
        %v395 = vunpack.c.l.b16 %v336
        %v396 = vunpack.c.l.b16 %v337
        %v397 = vunpack.c.l.b16 %v338
        %v398 = vunpack.c.l.b16 %v339
        %v399 = vunpack.c.l.b16 %v340
        %v400 = vunpack.c.l.b16 %v341
        %v401 = vunpack.c.l.b16 %v342
        %v402 = vunpack.c.l.b16 %v343
        %v403 = vunpack.c.l.b16 %v344
        %v404 = vunpack.c.l.b16 %v345
        %v405 = vunpack.c.l.b16 %v346
        %v406 = vunpack.c.l.b16 %v347
        %v407 = vunpack.c.l.b16 %v348
        %v408 = vunpack.c.l.b16 %v349
        %v409 = vpack.c.b16 %v392, %v391
        %v410 = vpack.c.b16 %v394, %v393
        %v411 = vpack.c.b16 %v396, %v395
        %v412 = vpack.c.b16 %v398, %v397
        %v413 = vpack.c.b16 %v400, %v399
        %v414 = vpack.c.b16 %v402, %v401
        %v415 = vpack.c.b16 %v404, %v403
        %v416 = vpack.c.b16 %v406, %v405
        %v417 = vpack.c.b16 %v408, %v407
        %vm427 = vcmask 130048
        %v429 = vsel %vm427, %v371, 0
        %431 = vmatprep.subr.bf16.mxu0 0
        %432 = vmatpush1.bf16.msra.mxu0 %v409
        %433 = vmatprep.subr.bf16.mxu0 0
        %434 = vmatpush1.bf16.msra.mxu0 %v410
        %435 = vmatprep.subr.bf16.mxu0 0
        %436 = vmatpush1.bf16.msra.mxu0 %v411
        %437 = vmatprep.subr.bf16.mxu0 0
        %438 = vmatpush1.bf16.msra.mxu0 %v412
        %439 = vmatprep.subr.bf16.mxu0 0
        %440 = vmatpush1.bf16.msra.mxu0 %v413
        %441 = vmatprep.subr.bf16.mxu0 0
        %442 = vmatpush1.bf16.msra.mxu0 %v414
        %443 = vmatprep.subr.bf16.mxu0 0
        %444 = vmatpush1.bf16.msra.mxu0 %v415
        %445 = vmatprep.subr.bf16.mxu0 0
        %446 = vmatpush1.bf16.msra.mxu0 %v416
        %447 = vmatprep.subr.bf16.mxu0 0
        %448 = vmatpush1.bf16.msra.mxu0 %v417
        %449 = vmatprep.subr.bf16.mxu0 0
        %450 = vmatpush1.bf16.msra.mxu0 0
        %451 = vmatprep.subr.bf16.mxu0 0
        %452 = vmatpush1.bf16.msra.mxu0 0
        %453 = vmatprep.subr.bf16.mxu0 0
        %454 = vmatpush1.bf16.msra.mxu0 0
        %455 = vmatprep.subr.bf16.mxu0 0
        %456 = vmatpush1.bf16.msra.mxu0 0
        %457 = vmatprep.subr.bf16.mxu0 0
        %458 = vmatpush1.bf16.msra.mxu0 0
        %459 = vmatprep.subr.bf16.mxu0 0
        %460 = vmatpush1.bf16.msra.mxu0 0
        %461 = vmatprep.subr.bf16.mxu0 0
        %462 = vmatpush1.bf16.msra.mxu0 0
        %463 = vmatprep.mubr.bf16.mxu0 %v429
        %464 = vmatmul.mubr.bf16.gmra.mrb[0].mxu0 %v364
        %v465 = vpop.f32.mrb[0].mxu0
        %v466 = vadd.f32 0.0, %v465
        %v467 = vpop.f32.mrb[0].mxu0
        %v468 = vpop.f32.mrb[0].mxu0
        %v469 = vadd.f32 0.0, %v468
        %v470 = vpop.f32.mrb[0].mxu0
        %471 = vdwg.mxu0
        %v473 = vunpack.c.l.b16 %v311
        %v474 = vunpack.c.h.b16 %v311
        %v475 = vpack.c.b16 %v473, %v352
        %v476 = vpack.c.b16 %v474, %v353
        %v496 = vunpack.c.l.b16 %v312
        %v497 = vunpack.c.l.b16 %v313
        %v498 = vunpack.c.l.b16 %v314
        %v499 = vunpack.c.l.b16 %v315
        %v500 = vunpack.c.l.b16 %v316
        %v501 = vunpack.c.l.b16 %v317
        %v502 = vunpack.c.l.b16 %v318
        %v503 = vunpack.c.l.b16 %v319
        %v504 = vunpack.c.l.b16 %v320
        %v505 = vunpack.c.l.b16 %v321
        %v506 = vunpack.c.l.b16 %v322
        %v507 = vunpack.c.l.b16 %v323
        %v508 = vunpack.c.l.b16 %v324
        %v509 = vunpack.c.l.b16 %v325
        %v510 = vunpack.c.l.b16 %v326
        %v511 = vunpack.c.l.b16 %v327
        %v512 = vunpack.c.l.b16 %v328
        %v513 = vunpack.c.l.b16 %v329
        %v514 = vpack.c.b16 %v497, %v496
        %v515 = vpack.c.b16 %v499, %v498
        %v516 = vpack.c.b16 %v501, %v500
        %v517 = vpack.c.b16 %v503, %v502
        %v518 = vpack.c.b16 %v505, %v504
        %v519 = vpack.c.b16 %v507, %v506
        %v520 = vpack.c.b16 %v509, %v508
        %v521 = vpack.c.b16 %v511, %v510
        %v522 = vpack.c.b16 %v513, %v512
        %v533 = vsel %vm427, %v476, 0
        %535 = vmatprep.subr.bf16.mxu0 0
        %536 = vmatpush1.bf16.msra.mxu0 %v514
        %537 = vmatprep.subr.bf16.mxu0 0
        %538 = vmatpush1.bf16.msra.mxu0 %v515
        %539 = vmatprep.subr.bf16.mxu0 0
        %540 = vmatpush1.bf16.msra.mxu0 %v516
        %541 = vmatprep.subr.bf16.mxu0 0
        %542 = vmatpush1.bf16.msra.mxu0 %v517
        %543 = vmatprep.subr.bf16.mxu0 0
        %544 = vmatpush1.bf16.msra.mxu0 %v518
        %545 = vmatprep.subr.bf16.mxu0 0
        %546 = vmatpush1.bf16.msra.mxu0 %v519
        %547 = vmatprep.subr.bf16.mxu0 0
        %548 = vmatpush1.bf16.msra.mxu0 %v520
        %549 = vmatprep.subr.bf16.mxu0 0
        %550 = vmatpush1.bf16.msra.mxu0 %v521
        %551 = vmatprep.subr.bf16.mxu0 0
        %552 = vmatpush1.bf16.msra.mxu0 %v522
        %553 = vmatprep.subr.bf16.mxu0 0
        %554 = vmatpush1.bf16.msra.mxu0 0
        %555 = vmatprep.subr.bf16.mxu0 0
        %556 = vmatpush1.bf16.msra.mxu0 0
        %557 = vmatprep.subr.bf16.mxu0 0
        %558 = vmatpush1.bf16.msra.mxu0 0
        %559 = vmatprep.subr.bf16.mxu0 0
        %560 = vmatpush1.bf16.msra.mxu0 0
        %561 = vmatprep.subr.bf16.mxu0 0
        %562 = vmatpush1.bf16.msra.mxu0 0
        %563 = vmatprep.subr.bf16.mxu0 0
        %564 = vmatpush1.bf16.msra.mxu0 0
        %565 = vmatprep.subr.bf16.mxu0 0
        %566 = vmatpush1.bf16.msra.mxu0 0
        %567 = vmatprep.mubr.bf16.mxu0 %v533
        %568 = vmatmul.mubr.bf16.gmra.mrb[0].mxu0 %v475
        %v569 = vpop.f32.mrb[0].mxu0
        %v570 = vadd.f32 %v466, %v569
        %v571 = vpop.f32.mrb[0].mxu0
        %v572 = vpop.f32.mrb[0].mxu0
        %v573 = vadd.f32 %v469, %v572
        %v574 = vpop.f32.mrb[0].mxu0
        %575 = vdwg.mxu0
        %v576 = vld [vmem:[%s300] sm:$0xee]
        %s577 = scalar_lea.vmem %s1, 144
        %v578 = vld [vmem:[%s577] sm:$0xf]
        %v579 = vld [vmem:[%s577 + $0x4] sm:$0xf]
        %v580 = vld [vmem:[%s577 + $0x8] sm:$0xf]
        %v581 = vld [vmem:[%s577 + $0xc] sm:$0xf]
        %v582 = vld [vmem:[%s577 + $0x10] sm:$0xf]
        %v583 = vld [vmem:[%s577 + $0x14] sm:$0xf]
        %v584 = vld [vmem:[%s577 + $0x18] sm:$0xf]
        %v585 = vld [vmem:[%s577 + $0x1c] sm:$0xf]
        %v586 = vld [vmem:[%s577 + $0x20] sm:$0xf]
        %v587 = vld [vmem:[%s577 + $0x24] sm:$0xf]
        %v588 = vld [vmem:[%s577 + $0x28] sm:$0xf]
        %v589 = vld [vmem:[%s577 + $0x2c] sm:$0xf]
        %v590 = vld [vmem:[%s577 + $0x30] sm:$0xf]
        %v591 = vld [vmem:[%s577 + $0x34] sm:$0xf]
        %v592 = vld [vmem:[%s577 + $0x38] sm:$0xf]
        %v593 = vld [vmem:[%s577 + $0x3c] sm:$0xf]
        %v594 = vld [vmem:[%s577 + $0x40] sm:$0xf]
        %v595 = vld [vmem:[%s577 + $0x44] sm:$0xf]
        %v597 = vunpack.c.l.b16 %v576
        %v598 = vunpack.c.h.b16 %v576
        %v599 = vpack.c.b16 %v354, %v597
        %v600 = vpack.c.b16 %v355, %v598
        %v601 = vrot.slane %v599, 1
        %v602 = vrot.slane %v600, 1
        %v622 = vunpack.c.l.b16 %v578
        %v623 = vunpack.c.l.b16 %v579
        %v624 = vunpack.c.l.b16 %v580
        %v625 = vunpack.c.l.b16 %v581
        %v626 = vunpack.c.l.b16 %v582
        %v627 = vunpack.c.l.b16 %v583
        %v628 = vunpack.c.l.b16 %v584
        %v629 = vunpack.c.l.b16 %v585
        %v630 = vunpack.c.l.b16 %v586
        %v631 = vunpack.c.l.b16 %v587
        %v632 = vunpack.c.l.b16 %v588
        %v633 = vunpack.c.l.b16 %v589
        %v634 = vunpack.c.l.b16 %v590
        %v635 = vunpack.c.l.b16 %v591
        %v636 = vunpack.c.l.b16 %v592
        %v637 = vunpack.c.l.b16 %v593
        %v638 = vunpack.c.l.b16 %v594
        %v639 = vunpack.c.l.b16 %v595
        %v640 = vpack.c.b16 %v623, %v622
        %v641 = vpack.c.b16 %v625, %v624
        %v642 = vpack.c.b16 %v627, %v626
        %v643 = vpack.c.b16 %v629, %v628
        %v644 = vpack.c.b16 %v631, %v630
        %v645 = vpack.c.b16 %v633, %v632
        %v646 = vpack.c.b16 %v635, %v634
        %v647 = vpack.c.b16 %v637, %v636
        %v648 = vpack.c.b16 %v639, %v638
        %v659 = vsel %vm427, %v602, 0
        %661 = vmatprep.subr.bf16.mxu0 0
        %662 = vmatpush1.bf16.msra.mxu0 %v640
        %663 = vmatprep.subr.bf16.mxu0 0
        %664 = vmatpush1.bf16.msra.mxu0 %v641
        %665 = vmatprep.subr.bf16.mxu0 0
        %666 = vmatpush1.bf16.msra.mxu0 %v642
        %667 = vmatprep.subr.bf16.mxu0 0
        %668 = vmatpush1.bf16.msra.mxu0 %v643
        %669 = vmatprep.subr.bf16.mxu0 0
        %670 = vmatpush1.bf16.msra.mxu0 %v644
        %671 = vmatprep.subr.bf16.mxu0 0
        %672 = vmatpush1.bf16.msra.mxu0 %v645
        %673 = vmatprep.subr.bf16.mxu0 0
        %674 = vmatpush1.bf16.msra.mxu0 %v646
        %675 = vmatprep.subr.bf16.mxu0 0
        %676 = vmatpush1.bf16.msra.mxu0 %v647
        %677 = vmatprep.subr.bf16.mxu0 0
        %678 = vmatpush1.bf16.msra.mxu0 %v648
        %679 = vmatprep.subr.bf16.mxu0 0
        %680 = vmatpush1.bf16.msra.mxu0 0
        %681 = vmatprep.subr.bf16.mxu0 0
        %682 = vmatpush1.bf16.msra.mxu0 0
        %683 = vmatprep.subr.bf16.mxu0 0
        %684 = vmatpush1.bf16.msra.mxu0 0
        %685 = vmatprep.subr.bf16.mxu0 0
        %686 = vmatpush1.bf16.msra.mxu0 0
        %687 = vmatprep.subr.bf16.mxu0 0
        %688 = vmatpush1.bf16.msra.mxu0 0
        %689 = vmatprep.subr.bf16.mxu0 0
        %690 = vmatpush1.bf16.msra.mxu0 0
        %691 = vmatprep.subr.bf16.mxu0 0
        %692 = vmatpush1.bf16.msra.mxu0 0
        %693 = vmatprep.mubr.bf16.mxu0 %v659
        %694 = vmatmul.mubr.bf16.gmra.mrb[0].mxu0 %v601
        %v695 = vpop.f32.mrb[0].mxu0
        %v696 = vadd.f32 0.0, %v695
        %v697 = vpop.f32.mrb[0].mxu0
        %v698 = vpop.f32.mrb[0].mxu0
        %v699 = vadd.f32 0.0, %v698
        %v700 = vpop.f32.mrb[0].mxu0
        %701 = vdwg.mxu0
        %v702 = vadd.f32 %v570, %v696
        %v703 = vadd.f32 %v573, %v699
        %v704 = vld [vmem:[%s2] sm:$0x1]
        %v706 = vlaneseq
        %v707 = vshrl.u32 %v706, 7
        %v708 = vsub.s32 0, %v707
        %v709 = vrot.slane %v704, %v708
        %v711 = vadd.f32 %v702, %v709
        %v712 = vadd.f32 %v703, %v709
        %v713 = vsub.f32 0.0, %v711
        %v714 = vsub.f32 0.0, %v712
        %v715 = vmul.f32 %v713, 1.442695
        %v716 = vpow.pop %v715
        %v717 = vmul.f32 %v714, 1.442695
        %v718 = vpow.pop %v717
        %v719 = vadd.f32 %v716, 1.0
        %v720 = vadd.f32 %v718, 1.0
        %v721 = vrcp.pop %v719
        %v722 = vrcp.pop %v720
        %v723 = vmul.f32 %v711, %v721
        %v724 = vmul.f32 %v712, %v722
        %s725 = smul.u32 %s25, 8
        %s726 = ssub.s32 %s725, 1
        %v727 = vlaneseq
        %v728 = vshrl.u32 %v727, 7
        %v729 = vadd.s32 %v728, 8
        %v730 = vstv %s726
        %v731 = vadd.s32 %v730, %v728
        %v732 = vadd.s32 %v730, %v729
        %vm733 = vcmp.ge.s32.totalorder %v731, 0
        %vm734 = vcmp.ge.s32.totalorder %v732, 0
        %vm735 = vcmp.lt.s32.totalorder %v731, 16
        %vm736 = vcmp.lt.s32.totalorder %v732, 16
        %vm737 = vmand %vm733, %vm735
        %vm738 = vmand %vm734, %vm736
        %v739 = vsel %vm737, %v723, 0.0
        %v740 = vsel %vm738, %v724, 0.0
        %v741 = vpack.c.bf16 %v740, %v739
        %v743 = vunpack.c.l.b16 %v741
        %v744 = vunpack.c.h.b16 %v741
        %v745 = vpack.c.b16 %v743, %v743
        %v746 = vpack.c.b16 %v744, %v744
        %vm749 = vcmask 519168
        %750 = vst.msk [vmem:[#allocation2] sm:$0xf] %vm749, %v745
        %vm751 = vcmask 516096
        %752 = vst.msk [vmem:[#allocation2 + $0x4] sm:$0x1] %vm751, %v746
        %v753 = vld [vmem:[#allocation2] sm:$0xf]
        %v754 = vld [vmem:[%s3] sm:$0xf]
        %v755 = vld [vmem:[%s3 + $0x4] sm:$0xf]
        %v756 = vld [vmem:[%s3 + $0x8] sm:$0xf]
        %v757 = vld [vmem:[%s3 + $0xc] sm:$0xf]
        %v758 = vld [vmem:[%s3 + $0x10] sm:$0xf]
        %v759 = vld [vmem:[%s3 + $0x14] sm:$0xf]
        %v760 = vld [vmem:[%s3 + $0x18] sm:$0xf]
        %v761 = vld [vmem:[%s3 + $0x1c] sm:$0xf]
        %v762 = vld [vmem:[#allocation2 + $0x4] sm:$0x1]
        %s763 = scalar_lea.vmem %s3, 32
        %v764 = vld [vmem:[%s763] sm:$0xf]
        %v765 = vld [vmem:[%s763 + $0x4] sm:$0xf]
        %v766 = vld [vmem:[%s763 + $0x8] sm:$0xf]
        %v767 = vld [vmem:[%s763 + $0xc] sm:$0xf]
        %v768 = vld [vmem:[%s763 + $0x10] sm:$0xf]
        %v769 = vld [vmem:[%s763 + $0x14] sm:$0xf]
        %v770 = vld [vmem:[%s763 + $0x18] sm:$0xf]
        %v771 = vld [vmem:[%s763 + $0x1c] sm:$0xf]
        %v774 = vunpack.c.l.b16 %v753
        %v775 = vunpack.c.l.b16 %v762
        %v776 = vpack.c.b16 %v775, %v774
        %v778 = vshrl.u32 %v776, 16
        %v780 = vshll.u32 %v776, 16
        %v782 = vrot.slane %v780, 1
        %v783 = vor.u32 %v778, %v782
        %v792 = vunpack.c.l.b16 %v764
        %v793 = vunpack.c.l.b16 %v765
        %v794 = vunpack.c.l.b16 %v766
        %v795 = vunpack.c.l.b16 %v767
        %v796 = vunpack.c.l.b16 %v768
        %v797 = vunpack.c.l.b16 %v769
        %v798 = vunpack.c.l.b16 %v770
        %v799 = vunpack.c.l.b16 %v771
        %v800 = vpack.c.b16 %v793, %v792
        %v801 = vpack.c.b16 %v795, %v794
        %v802 = vpack.c.b16 %v797, %v796
        %v803 = vpack.c.b16 %v799, %v798
        %vm808 = vcmask 523264
        %v810 = vsel %vm808, %v783, 0
        %812 = vmatprep.subr.bf16.mxu0 0
        %813 = vmatpush1.bf16.msra.mxu0 %v800
        %814 = vmatprep.subr.bf16.mxu0 0
        %815 = vmatpush1.bf16.msra.mxu0 %v801
        %816 = vmatprep.subr.bf16.mxu0 0
        %817 = vmatpush1.bf16.msra.mxu0 %v802
        %818 = vmatprep.subr.bf16.mxu0 0
        %819 = vmatpush1.bf16.msra.mxu0 %v803
        %820 = vmatprep.subr.bf16.mxu0 0
        %821 = vmatpush1.bf16.msra.mxu0 0
        %822 = vmatprep.subr.bf16.mxu0 0
        %823 = vmatpush1.bf16.msra.mxu0 0
        %824 = vmatprep.subr.bf16.mxu0 0
        %825 = vmatpush1.bf16.msra.mxu0 0
        %826 = vmatprep.subr.bf16.mxu0 0
        %827 = vmatpush1.bf16.msra.mxu0 0
        %828 = vmatprep.subr.bf16.mxu0 0
        %829 = vmatpush1.bf16.msra.mxu0 0
        %830 = vmatprep.subr.bf16.mxu0 0
        %831 = vmatpush1.bf16.msra.mxu0 0
        %832 = vmatprep.subr.bf16.mxu0 0
        %833 = vmatpush1.bf16.msra.mxu0 0
        %834 = vmatprep.subr.bf16.mxu0 0
        %835 = vmatpush1.bf16.msra.mxu0 0
        %836 = vmatprep.subr.bf16.mxu0 0
        %837 = vmatpush1.bf16.msra.mxu0 0
        %838 = vmatprep.subr.bf16.mxu0 0
        %839 = vmatpush1.bf16.msra.mxu0 0
        %840 = vmatprep.subr.bf16.mxu0 0
        %841 = vmatpush1.bf16.msra.mxu0 0
        %842 = vmatprep.subr.bf16.mxu0 0
        %843 = vmatpush1.bf16.msra.mxu0 0
        %844 = vmatprep.mubr.bf16.mxu0 0
        %845 = vmatmul.mubr.bf16.gmra.mrb[0].mxu0 %v810
        %v846 = vpop.f32.mrb[0].mxu0
        %v847 = vadd.f32 0.0, %v846
        %v848 = vpop.f32.mrb[0].mxu0
        %v849 = vpop.f32.mrb[0].mxu0
        %v850 = vpop.f32.mrb[0].mxu0
        %851 = vdwg.mxu0
        %v860 = vunpack.c.l.b16 %v754
        %v861 = vunpack.c.l.b16 %v755
        %v862 = vunpack.c.l.b16 %v756
        %v863 = vunpack.c.l.b16 %v757
        %v864 = vunpack.c.l.b16 %v758
        %v865 = vunpack.c.l.b16 %v759
        %v866 = vunpack.c.l.b16 %v760
        %v867 = vunpack.c.l.b16 %v761
        %v868 = vpack.c.b16 %v861, %v860
        %v869 = vpack.c.b16 %v863, %v862
        %v870 = vpack.c.b16 %v865, %v864
        %v871 = vpack.c.b16 %v867, %v866
        %v877 = vsel %vm808, %v753, 0
        %879 = vmatprep.subr.bf16.mxu0 0
        %880 = vmatpush1.bf16.msra.mxu0 %v868
        %881 = vmatprep.subr.bf16.mxu0 0
        %882 = vmatpush1.bf16.msra.mxu0 %v869
        %883 = vmatprep.subr.bf16.mxu0 0
        %884 = vmatpush1.bf16.msra.mxu0 %v870
        %885 = vmatprep.subr.bf16.mxu0 0
        %886 = vmatpush1.bf16.msra.mxu0 %v871
        %887 = vmatprep.subr.bf16.mxu0 0
        %888 = vmatpush1.bf16.msra.mxu0 0
        %889 = vmatprep.subr.bf16.mxu0 0
        %890 = vmatpush1.bf16.msra.mxu0 0
        %891 = vmatprep.subr.bf16.mxu0 0
        %892 = vmatpush1.bf16.msra.mxu0 0
        %893 = vmatprep.subr.bf16.mxu0 0
        %894 = vmatpush1.bf16.msra.mxu0 0
        %895 = vmatprep.subr.bf16.mxu0 0
        %896 = vmatpush1.bf16.msra.mxu0 0
        %897 = vmatprep.subr.bf16.mxu0 0
        %898 = vmatpush1.bf16.msra.mxu0 0
        %899 = vmatprep.subr.bf16.mxu0 0
        %900 = vmatpush1.bf16.msra.mxu0 0
        %901 = vmatprep.subr.bf16.mxu0 0
        %902 = vmatpush1.bf16.msra.mxu0 0
        %903 = vmatprep.subr.bf16.mxu0 0
        %904 = vmatpush1.bf16.msra.mxu0 0
        %905 = vmatprep.subr.bf16.mxu0 0
        %906 = vmatpush1.bf16.msra.mxu0 0
        %907 = vmatprep.subr.bf16.mxu0 0
        %908 = vmatpush1.bf16.msra.mxu0 0
        %909 = vmatprep.subr.bf16.mxu0 0
        %910 = vmatpush1.bf16.msra.mxu0 0
        %911 = vmatprep.mubr.bf16.mxu0 0
        %912 = vmatmul.mubr.bf16.gmra.mrb[0].mxu0 %v877
        %v913 = vpop.f32.mrb[0].mxu0
        %v914 = vadd.f32 %v847, %v913
        %v915 = vpop.f32.mrb[0].mxu0
        %v916 = vpop.f32.mrb[0].mxu0
        %v917 = vpop.f32.mrb[0].mxu0
        %918 = vdwg.mxu0
        %v919 = vld [vmem:[#allocation2] sm:$0xe]
        %s920 = scalar_lea.vmem %s3, 64
        %v921 = vld [vmem:[%s920] sm:$0xf]
        %v922 = vld [vmem:[%s920 + $0x4] sm:$0xf]
        %v923 = vld [vmem:[%s920 + $0x8] sm:$0xf]
        %v924 = vld [vmem:[%s920 + $0xc] sm:$0xf]
        %v925 = vld [vmem:[%s920 + $0x10] sm:$0xf]
        %v926 = vld [vmem:[%s920 + $0x14] sm:$0xf]
        %v927 = vld [vmem:[%s920 + $0x18] sm:$0xf]
        %v928 = vld [vmem:[%s920 + $0x1c] sm:$0xf]
        %v930 = vunpack.c.l.b16 %v919
        %v931 = vpack.c.b16 %v775, %v930
        %v932 = vrot.slane %v931, 1
        %v941 = vunpack.c.l.b16 %v921
        %v942 = vunpack.c.l.b16 %v922
        %v943 = vunpack.c.l.b16 %v923
        %v944 = vunpack.c.l.b16 %v924
        %v945 = vunpack.c.l.b16 %v925
        %v946 = vunpack.c.l.b16 %v926
        %v947 = vunpack.c.l.b16 %v927
        %v948 = vunpack.c.l.b16 %v928
        %v949 = vpack.c.b16 %v942, %v941
        %v950 = vpack.c.b16 %v944, %v943
        %v951 = vpack.c.b16 %v946, %v945
        %v952 = vpack.c.b16 %v948, %v947
        %v958 = vsel %vm808, %v932, 0
        %960 = vmatprep.subr.bf16.mxu0 0
        %961 = vmatpush1.bf16.msra.mxu0 %v949
        %962 = vmatprep.subr.bf16.mxu0 0
        %963 = vmatpush1.bf16.msra.mxu0 %v950
        %964 = vmatprep.subr.bf16.mxu0 0
        %965 = vmatpush1.bf16.msra.mxu0 %v951
        %966 = vmatprep.subr.bf16.mxu0 0
        %967 = vmatpush1.bf16.msra.mxu0 %v952
        %968 = vmatprep.subr.bf16.mxu0 0
        %969 = vmatpush1.bf16.msra.mxu0 0
        %970 = vmatprep.subr.bf16.mxu0 0
        %971 = vmatpush1.bf16.msra.mxu0 0
        %972 = vmatprep.subr.bf16.mxu0 0
        %973 = vmatpush1.bf16.msra.mxu0 0
        %974 = vmatprep.subr.bf16.mxu0 0
        %975 = vmatpush1.bf16.msra.mxu0 0
        %976 = vmatprep.subr.bf16.mxu0 0
        %977 = vmatpush1.bf16.msra.mxu0 0
        %978 = vmatprep.subr.bf16.mxu0 0
        %979 = vmatpush1.bf16.msra.mxu0 0
        %980 = vmatprep.subr.bf16.mxu0 0
        %981 = vmatpush1.bf16.msra.mxu0 0
        %982 = vmatprep.subr.bf16.mxu0 0
        %983 = vmatpush1.bf16.msra.mxu0 0
        %984 = vmatprep.subr.bf16.mxu0 0
        %985 = vmatpush1.bf16.msra.mxu0 0
        %986 = vmatprep.subr.bf16.mxu0 0
        %987 = vmatpush1.bf16.msra.mxu0 0
        %988 = vmatprep.subr.bf16.mxu0 0
        %989 = vmatpush1.bf16.msra.mxu0 0
        %990 = vmatprep.subr.bf16.mxu0 0
        %991 = vmatpush1.bf16.msra.mxu0 0
        %992 = vmatprep.mubr.bf16.mxu0 0
        %993 = vmatmul.mubr.bf16.gmra.mrb[0].mxu0 %v958
        %v994 = vpop.f32.mrb[0].mxu0
        %v995 = vadd.f32 0.0, %v994
        %v996 = vpop.f32.mrb[0].mxu0
        %v997 = vpop.f32.mrb[0].mxu0
        %v998 = vpop.f32.mrb[0].mxu0
        %999 = vdwg.mxu0
        %v1000 = vadd.f32 %v914, %v995
        %v1001 = vld [vmem:[%s4] sm:$0x1]
        %v1003 = vlaneseq
        %v1004 = vshrl.u32 %v1003, 7
        %v1005 = vsub.s32 0, %v1004
        %v1006 = vrot.slane %v1001, %v1005
        %v1008 = vadd.f32 %v1000, %v1006
        %v1009 = vsub.f32 0.0, %v1008
        %v1010 = vmul.f32 %v1009, 1.442695
        %v1011 = vpow.pop %v1010
        %v1012 = vadd.f32 %v1011, 1.0
        %v1013 = vrcp.pop %v1012
        %v1014 = vmul.f32 %v1008, %v1013
        %v1015 = vld [vmem:[%s308] sm:$0xf]
        %v1016 = vunpack.c.l.bf16 %v1015
        %v1017 = vadd.f32 %v1014, %v1016
        %1018 = vst [vmem:[%s291] sm:$0xff] %v1017
        %s1019 = sand.u32 %s182, 1
        %s1020 = scalar_lea.sflag [#allocation4], %s1019
        %s1021 = sand.u32 %s182, 1
        %s1022 = smul.addr %s1021, 8
        %s1023 = scalar_lea.vmem [#allocation3], %s1022
        // Predicated region
        $region45: #{tpu_custom_call.1} parent=43 // pred_check
          %p1024 = pneg %p192
        $region46: #{tpu_custom_call.1} parent=43 // pred_check_branch
          %1026 = sbr.rel (%p1024) target = $region48
        $region47: #{tpu_custom_call.1} parent=43 // pred_region
          %s1028 = ssub.s32 128, 128
          %1029 = vsyncadd %s1020, %s1028
          %s1030 = smul.addr %s24, 2
          %s1031 = sadd.s32 %s25, %s1030
          %s1032 = smul.addr %s1031, 128
          %s1033 = scalar_lea.hbm %s6, %s1032
          %s1035 = sshll.u32 %s1023, 4
          %s1036 = int_to_ptr.vmem [resolvable:$true] %s1035
          %1038 = dma.vmem_to_hbm [thread:$0]  %s1036, 128, %s1033, %s1020
        $region48: #{tpu_custom_call.1} parent=43 // pred_fallthru
          _
      $region44: #{tpu_custom_call.1} parent=5 // pred_fallthru
        _
      %p1039 = scmp.le.s32.totalorder 2, %s15
      // Predicated region
      $region49: #{tpu_custom_call.1} parent=5 // pred_check
        %p1040 = pneg %p1039
      $region50: #{tpu_custom_call.1} parent=5 // pred_check_branch
        %1042 = sbr.rel (%p1040) target = $region52
      $region51: #{tpu_custom_call.1} parent=5 // pred_region
        %s1043 = ssub.s32 %s15, 2
        // Predicated region
        $region53: #{tpu_custom_call.1} parent=51 // pred_check
          %p1044 = pneg %p198
        $region54: #{tpu_custom_call.1} parent=51 // pred_check_branch
          %1046 = sbr.rel (%p1044) target = $region56
        $region55: #{tpu_custom_call.1} parent=51 // pred_region
          %s1047 = sand.u32 %s183, 1
          %s1048 = scalar_lea.sflag [#allocation4], %s1047
          %s1049 = sand.u32 %s183, 1
          %s1050 = smul.addr %s1049, 8
          %s1051 = scalar_lea.vmem [#allocation3], %s1050
          %1052 = dma.done %s1048, 128
        $region56: #{tpu_custom_call.1} parent=51 // pred_fallthru
          _
      $region52: #{tpu_custom_call.1} parent=5 // pred_fallthru
        _
    $region6: #{tpu_custom_call.1} parent=1 // loop_footer
      %s19 = sadd.s32 1, %s15
    $region7: #{tpu_custom_call.1} parent=1 // loop_footer_branch
      %14 = sbr.rel target = $region3
    $region8: #{tpu_custom_call.1} parent=1 // loop_exit
      _
    %1053 = vsyncpa [#allocation4], 1
    %s1054 = scalar_lea.sflag [#allocation4], 1
    %1055 = vsyncpa %s1054, 1

</llo_original>
